<compile_context>
chip_gen: v7x
topology: tpu7x:2x2x1
jax: 0.10.0
libtpu: 0.0.40
codegen_flags: <defaults>
</compile_context>

<pallas_src>
import math

import jax
import jax.numpy as jnp
import numpy as np
from jax import lax
from jax.experimental import pallas as pl
from jax.experimental.pallas import tpu as pltpu


# ----------------------------------------------------------------------------
# Kernel
# ----------------------------------------------------------------------------
def make_attention_kernel(mxu_dtype):
    def kernel(x_ref, w_ref, mask_ref, o_ref):
        two_h = w_ref.shape[1]
        h_dim = two_h // 2

        x = x_ref[...]                                        # (TBN, D)
        xc = x.astype(mxu_dtype)

        # Fused projection: one (TBN, D) @ (D, 2H) matmul (lane-dense weight).
        h = jnp.dot(xc, w_ref[...].astype(mxu_dtype),
                    preferred_element_type=jnp.float32)       # (TBN, 2H) f32
        h1 = h[:, :h_dim].astype(mxu_dtype)
        h2 = h[:, h_dim:].astype(mxu_dtype)

        # Flat attention logits: (TBN, TBN) = h1 @ h2^T, plus the additive
        # block-diagonal (+ self-exclusion) mask.  Off-graph / self entries
        # carry -1e30 -> exp underflows to exactly 0, so each graph's softmax
        # is unchanged (and a fully-masked row degrades to uniform, not NaN).
        logits = lax.dot_general(h1, h2, (((1,), (1,)), ((), ())),
                                 preferred_element_type=jnp.float32)
        logits = logits + mask_ref[...]

        # Row softmax (vector math kept in f32 on every generation).
        m = jnp.max(logits, axis=-1, keepdims=True)
        e = jnp.exp(logits - m)
        denom = jnp.sum(e, axis=-1, keepdims=True)
        p = e * pl.reciprocal(denom, approx=False)            # exact (review)

        # Weighted sum of the input vectors: one more flat MXU matmul.
        out = jnp.dot(p.astype(mxu_dtype), xc,
                      preferred_element_type=jnp.float32)     # (TBN, D)
        o_ref[...] = out.astype(o_ref.dtype)

    return kernel


# ----------------------------------------------------------------------------
# Wrapper
# ----------------------------------------------------------------------------
def _vmem_limit_bytes():
    """Generation-aware scoped-VMEM cap: ~75% of physical, clamped 32..96 MiB."""
    cap = 64 * 1024 * 1024                       # conservative fallback (v7x)
    try:
        cap = int(pltpu.get_tpu_info().vmem_capacity_bytes)
    except Exception:
        pass
    return int(min(max(cap * 3 // 4, 32 * 1024 * 1024), 96 * 1024 * 1024))


def attention_forward(x, w1, w2, *, exclude_self=True, block_b=None,
                      mxu_dtype=None):
    """Pallas forward of AttentionLayer.

    x: (B, N, D); w1/w2: (D, H) (nn.Linear weights pre-transposed).
    mxu_dtype: dtype of MXU operands (accumulation stays f32).  bf16 is
      recommended on v6e/v7x; default keeps the input dtype.
    """
    B, N, D = x.shape
    H = w1.shape[1]
    if mxu_dtype is None:
        mxu_dtype = x.dtype

    # ---- block-size selection ------------------------------------------
    # TBN = block_b * N flattened rows per grid step.  Target ~512 rows: it
    # fills the MXU M dimension and amortizes the ~0.35us/step overhead,
    # while the (TBN, TBN) f32 logits slab stays ~1 MiB.  Keep >= 2 grid
    # steps when B allows so both v7x TensorCores get work.  TBN must be a
    # multiple of 8 for the sublane tiling constraint.
    granule = 8 // math.gcd(N, 8)          # block_b granule => TBN % 8 == 0
    if block_b is None:
        block_b = max(1, min(B, max(1, 512 // N)))
        if block_b >= B and B > 1:
            block_b = pl.cdiv(B, 2)
    block_b = -(-block_b // granule) * granule
    cap_b = -(-max(1, 1024 // N) // granule) * granule      # keep TBN <= ~1024
    block_b = max(granule, min(block_b, cap_b))

    TBN = block_b * N
    B_pad = pl.cdiv(B, block_b) * block_b
    if B_pad != B:
        x = jnp.pad(x, ((0, B_pad - B), (0, 0), (0, 0)))
    x_flat = x.reshape(B_pad * N, D)       # contiguous => free metadata reshape
    grid = (B_pad // block_b,)

    # Fused projection weights: (D, 2H) -> 2H = 128 lanes for H = 64.
    wcat = jnp.concatenate([w1, w2], axis=1)

    # Additive mask over the flattened (TBN, TBN) logits:
    #   0      same graph (and not the diagonal when exclude_self)
    #   -1e30  different graph, or the diagonal when exclude_self
    idx = np.arange(TBN)
    keep = (idx[:, None] // N) == (idx[None, :] // N)
    if exclude_self:
        keep = keep & (idx[:, None] != idx[None, :])
    add_mask = jnp.asarray(np.where(keep, 0.0, -1e30), dtype=jnp.float32)

    # ---- advisory cost estimate (padded batch, all operands) -------------
    steps = B_pad // block_b
    x_isize = jnp.dtype(x.dtype).itemsize
    w_isize = jnp.dtype(w1.dtype).itemsize
    flops = steps * (2 * TBN * D * 2 * H          # fused projection
                     + 2 * TBN * TBN * H          # logits
                     + 2 * TBN * TBN * D)         # p @ x
    cost = pl.CostEstimate(
        flops=int(flops),
        transcendentals=int(steps * TBN * TBN),               # softmax exp
        bytes_accessed=int(2 * B_pad * N * D * x_isize        # x in + out
                           + 2 * D * H * w_isize              # fused weights
                           + TBN * TBN * 4))                  # additive mask

    kernel = make_attention_kernel(mxu_dtype)

    out_flat = pl.pallas_call(
        kernel,
        out_shape=jax.ShapeDtypeStruct((B_pad * N, D), x.dtype),
        grid_spec=pltpu.PrefetchScalarGridSpec(
            num_scalar_prefetch=0,
            grid=grid,
            in_specs=[
                # x rows for this batch block (block is contiguous in HBM).
                pl.BlockSpec((TBN, D), lambda b: (b, 0)),
                # Constant-index blocks below are DMA'd once and stay
                # resident across the whole grid (the default extra pipeline
                # buffer costs only a few KiB / ~1 MiB of VMEM).
                pl.BlockSpec((D, 2 * H), lambda b: (0, 0)),    # fused weights
                pl.BlockSpec((TBN, TBN), lambda b: (0, 0)),    # additive mask
            ],
            out_specs=pl.BlockSpec((TBN, D), lambda b: (b, 0)),
        ),
        compiler_params=pltpu.CompilerParams(
            dimension_semantics=("parallel",),
            vmem_limit_bytes=_vmem_limit_bytes(),
        ),
        cost_estimate=cost,
    )(x_flat, wcat, add_mask)

    return out_flat.reshape(B_pad, N, D)[:B]


# ----------------------------------------------------------------------------
# Pure-JAX reference (same math, no Pallas).
# ----------------------------------------------------------------------------
def attention_reference(x, w1, w2, exclude_self=True):
    h1 = jnp.einsum("bnd,dh->bnh", x, w1)
    h2 = jnp.einsum("bnd,dh->bnh", x, w2)
    logits = jnp.einsum("bqh,bkh->bqk", h1, h2)
    if exclude_self:
        n = x.shape[1]
        eye = jnp.eye(n, dtype=bool)
        logits = jnp.where(eye[None], -jnp.inf, logits)
    m = jnp.max(logits, axis=-1, keepdims=True)
    e = jnp.exp(logits - m)
    p = e / jnp.sum(e, axis=-1, keepdims=True)
    return jnp.einsum("bqk,bkd->bqd", p, x)


# ----------------------------------------------------------------------------
if __name__ == "__main__":
    B, N, D, H = 2, 8, 16, 64   # batch, num entities, input_dim, hidden_dim

    key = jax.random.PRNGKey(0)
    kx, k1, k2 = jax.random.split(key, 3)

    x = jax.random.normal(kx, (B, N, D), jnp.float32)
    # torch nn.Linear default init: U(-1/sqrt(fan_in), 1/sqrt(fan_in)),
    # stored pre-transposed as (in_dim, out_dim).
    bound = 1.0 / math.sqrt(D)
    w1 = jax.random.uniform(k1, (D, H), jnp.float32, -bound, bound)
    w2 = jax.random.uniform(k2, (D, H), jnp.float32, -bound, bound)

    ref = attention_reference(x, w1, w2, exclude_self=True)

    # Default f32 MXU-operand path: tolerance covers MXU precision deltas.
    out = attention_forward(x, w1, w2, exclude_self=True)
    out = jax.block_until_ready(out)
    np.testing.assert_allclose(np.asarray(out), np.asarray(ref),
                               rtol=1e-2, atol=1e-2)

    # bf16 MXU-operand path (recommended on v6e/v7x): looser sanity check.
    out_bf16 = attention_forward(x, w1, w2, exclude_self=True,
                                 mxu_dtype=jnp.bfloat16)
    out_bf16 = jax.block_until_ready(out_bf16)
    np.testing.assert_allclose(np.asarray(out_bf16), np.asarray(ref),
                               rtol=1e-1, atol=1e-1)

    print("KERNEL_OK")
</pallas_src>

<mosaic_0001>
module attributes {stable_mosaic.version = 11 : i64} {
  func.func @kernel(%arg0: i32, %arg1: memref<8x16xf32, #tpu.memory_space<vmem>>, %arg2: memref<16x128xf32, #tpu.memory_space<vmem>>, %arg3: memref<8x8xf32, #tpu.memory_space<vmem>>, %arg4: memref<8x16xf32, #tpu.memory_space<vmem>>) attributes {dimension_semantics = [#tpu.dimension_semantics<parallel>], iteration_bounds = array<i64: 2>, scalar_prefetch = 0 : i64, scratch_operands = 0 : i64, tpu.core_type = #tpu.core_type<tc>, window_params = [{transform_indices = @transform_0, window_bounds = array<i64: 8, 16>}, {pipeline_mode = #tpu.pipeline_mode<synchronous>, transform_indices = @transform_1, window_bounds = array<i64: 16, 128>}, {pipeline_mode = #tpu.pipeline_mode<synchronous>, transform_indices = @transform_2, window_bounds = array<i64: 8, 8>}, {transform_indices = @transform_3, window_bounds = array<i64: 8, 16>}]} {
    %c0 = arith.constant 0 : index
    %c0_0 = arith.constant 0 : index
    %0 = vector.load %arg1[%c0, %c0_0] : memref<8x16xf32, #tpu.memory_space<vmem>>, vector<8x16xf32>
    %c0_1 = arith.constant 0 : index
    %c0_2 = arith.constant 0 : index
    %1 = vector.load %arg2[%c0_1, %c0_2] : memref<16x128xf32, #tpu.memory_space<vmem>>, vector<16x128xf32>
    %cst = arith.constant dense<0.000000e+00> : vector<8x128xf32>
    %2 = tpu.matmul %0, %1, %cst {dimension_numbers = #tpu.dot_dimension_numbers<[1], [0], [0], [1], [0, 0, 1, 1], [], []>} : vector<8x16xf32>, vector<16x128xf32>, vector<8x128xf32> -> vector<8x128xf32>
    %3 = vector.extract_strided_slice %2 {offsets = [0, 0], sizes = [8, 64], strides = [1, 1]} : vector<8x128xf32> to vector<8x64xf32>
    %4 = vector.extract_strided_slice %2 {offsets = [0, 64], sizes = [8, 64], strides = [1, 1]} : vector<8x128xf32> to vector<8x64xf32>
    %cst_3 = arith.constant dense<0.000000e+00> : vector<8x8xf32>
    %5 = tpu.matmul %3, %4, %cst_3 {dimension_numbers = #tpu.dot_dimension_numbers<[1], [1], [0], [0], [0, 0, 1, 0], [], []>} : vector<8x64xf32>, vector<8x64xf32>, vector<8x8xf32> -> vector<8x8xf32>
    %c0_4 = arith.constant 0 : index
    %c0_5 = arith.constant 0 : index
    %6 = vector.load %arg3[%c0_4, %c0_5] : memref<8x8xf32, #tpu.memory_space<vmem>>, vector<8x8xf32>
    %7 = arith.addf %5, %6 : vector<8x8xf32>
    %cst_6 = arith.constant dense<0xFF800000> : vector<8xf32>
    %8 = vector.multi_reduction <maximumf>, %7, %cst_6 [1] : vector<8x8xf32> to vector<8xf32>
    %9 = vector.shape_cast %8 : vector<8xf32> to vector<8x1xf32>
    %10 = vector.broadcast %9 : vector<8x1xf32> to vector<8x8xf32>
    %11 = arith.subf %7, %10 : vector<8x8xf32>
    %12 = math.exp %11 : vector<8x8xf32>
    %cst_7 = arith.constant dense<0.000000e+00> : vector<8xf32>
    %13 = vector.multi_reduction <add>, %12, %cst_7 [1] : vector<8x8xf32> to vector<8xf32>
    %14 = vector.shape_cast %13 : vector<8xf32> to vector<8x1xf32>
    %15 = tpu.reciprocal %14 : vector<8x1xf32> -> vector<8x1xf32>
    %16 = vector.broadcast %15 : vector<8x1xf32> to vector<8x8xf32>
    %17 = arith.mulf %12, %16 : vector<8x8xf32>
    %cst_8 = arith.constant dense<0.000000e+00> : vector<8x16xf32>
    %18 = tpu.matmul %17, %0, %cst_8 {dimension_numbers = #tpu.dot_dimension_numbers<[1], [0], [0], [1], [0, 0, 1, 1], [], []>} : vector<8x8xf32>, vector<8x16xf32>, vector<8x16xf32> -> vector<8x16xf32>
    %c0_9 = arith.constant 0 : index
    %c0_10 = arith.constant 0 : index
    %19 = vector.load %arg4[%c0_9, %c0_10] : memref<8x16xf32, #tpu.memory_space<vmem>>, vector<8x16xf32>
    tpu.vector_store %arg4[%c0_9, %c0_10], %18 {strides = array<i32>} : memref<8x16xf32, #tpu.memory_space<vmem>>, vector<8x16xf32>,
    return
  }
  func.func @transform_0(%arg0: i32) -> (i32, i32) {
    %c0_i32 = arith.constant 0 : i32
    %c0_i32_0 = arith.constant 0 : i32
    return %arg0, %c0_i32 : i32, i32
  }
  func.func @transform_1(%arg0: i32) -> (i32, i32) {
    %c0_i32 = arith.constant 0 : i32
    %c0_i32_0 = arith.constant 0 : i32
    %c0_i32_1 = arith.constant 0 : i32
    return %c0_i32, %c0_i32_0 : i32, i32
  }
  func.func @transform_2(%arg0: i32) -> (i32, i32) {
    %c0_i32 = arith.constant 0 : i32
    %c0_i32_0 = arith.constant 0 : i32
    %c0_i32_1 = arith.constant 0 : i32
    return %c0_i32, %c0_i32_0 : i32, i32
  }
  func.func @transform_3(%arg0: i32) -> (i32, i32) {
    %c0_i32 = arith.constant 0 : i32
    %c0_i32_0 = arith.constant 0 : i32
    return %arg0, %c0_i32 : i32, i32
  }
}

</mosaic_0001>

<llo_original>
// kernel: tpu_custom_call.1
$region0: #{tpu_custom_call.1}
  #allocation0 [shape = 'u32[]', space=smem, size = 0x4, offset = 0x4, fixed_abs, tag = 'smem constant byte address 0x4 - core index']
  #allocation1 [shape = 'u32[144,128]{1,0:T(1,128)}', space=vmem, size = 0x12000, scoped, tag = 'internal scratch']
  %s0 = inlined_call_operand.hbm [shape: f32[16,16], index: 0, kind: input, shape index: {}]
  %s1 = inlined_call_operand.hbm [shape: f32[16,128], index: 1, kind: input, shape index: {}]
  %s2 = inlined_call_operand.hbm [shape: f32[8,8], index: 2, kind: input, shape index: {}]
  %s3 = inlined_call_operand.hbm [shape: f32[16,16], index: 3, kind: output, shape index: {}]
  %s4 = sld [smem:[#allocation0]]
  $region57: #{tpu_custom_call.1} parent=0
    _
  %s6 = ssub.s32 1, %s4
  %s7 = scalar_select 0, %s6, %s4
  $region1: #{tpu_custom_call.1} parent=0
    #allocation2 [shape = 'u8[8192]{0}', space=vmem, size = 0x2000, scoped, tag = 'input window, operand 0']
    #allocation3 [shape = 's32[2]{0}', space=sflag, size = 0x8, scoped, tag = 'scoped memory for tpu_custom_call.1']
    #allocation4 [shape = 's32[2]{0}', space=sflag, size = 0x8, scoped, tag = 'scoped memory for tpu_custom_call.1']
    #allocation5 [shape = 'u8[8192]{0}', space=vmem, size = 0x2000, scoped, tag = 'input window, operand 1, single buffered']
    #allocation6 [shape = 's32[1]{0}', space=sflag, size = 0x4, scoped, tag = 'scoped memory for tpu_custom_call.1']
    #allocation7 [shape = 'u8[4096]{0}', space=vmem, size = 0x1000, scoped, tag = 'input window, operand 2, single buffered']
    #allocation8 [shape = 'u8[8192]{0}', space=vmem, size = 0x2000, scoped, tag = 'output window, operand 0']
    %8 = vsyncpa [#allocation3], 0
    %s9 = scalar_lea.sflag [#allocation3], 1
    %10 = vsyncpa %s9, 0
    %11 = vsyncpa [#allocation6], 0
    %12 = vsyncpa [#allocation4], 0
    %s13 = scalar_lea.sflag [#allocation4], 1
    %14 = vsyncpa %s13, 0
    loop: start=0, step=1, limit=4
    $region2: #{tpu_custom_call.1} parent=1 // loop_pre_header
      _
    $region3: #{tpu_custom_call.1} parent=1 // loop_header
      %s16 = sphi 0, %s20
      %p17 = scmp.ge.s32.totalorder %s16, 4
      %s26 = sphi 0, %s28
      %s29 = sphi 0, %s26
      %s30 = sphi 0, %s29
      %s46 = sphi 0, %s30
      %s50 = sphi 0, %s50
      %s52 = sphi 0, %s50
      %s53 = sphi 0, %s52
      %s67 = sphi 0, %s53
      %s71 = sphi 0, %s71
      %s73 = sphi 0, %s71
      %s74 = sphi 0, %s73
      %s88 = sphi 0, %s74
      %s94 = sphi 0, %s96
      %s97 = sphi 0, %s94
      %s98 = sphi 0, %s97
      %s114 = sphi 0, %s98
    $region4: #{tpu_custom_call.1} parent=1 // loop_header_branch
      %19 = sbr.rel (%p17) target = $region8
    $region5: #{tpu_custom_call.1} parent=1 // loop_body
      %s21 = ssub.s32 %s16, 1
      %s22 = ssub.s32 %s16, 2
      %s23 = sadd.s32 %s16, 1
      %s24 = ssub.s32 %s16, %s23
      %p25 = scmp.eq.s32.totalorder %s24, 0
      %s27 = sadd.s32 %s26, 1
      %s28 = scalar_select %p25, %s26, %s27
      %p31 = pneg %p25
      %p32 = scmp.eq.s32.totalorder %s16, 1
      %p33 = por %p31, %p32
      %p34 = scmp.ne.s32.totalorder %s26, %s29
      %p35 = scmp.eq.s32.totalorder %s16, 0
      %p36 = por %p34, %p35
      %p37 = scmp.ne.s32.totalorder %s26, %s29
      %p38 = scmp.eq.s32.totalorder %s21, 1
      %p39 = por %p37, %p38
      %p40 = scmp.ne.s32.totalorder %s29, %s30
      %p41 = scmp.eq.s32.totalorder %s21, 0
      %p42 = por %p40, %p41
      %p43 = scmp.ne.s32.totalorder %s29, %s30
      %p44 = scmp.eq.s32.totalorder %s22, 1
      %p45 = por %p43, %p44
      %p47 = scmp.ne.s32.totalorder %s30, %s46
      %p48 = scmp.eq.s32.totalorder %s22, 0
      %p49 = por %p47, %p48
      %s51 = sadd.s32 %s50, 1
      %p54 = scmp.eq.s32.totalorder %s16, 1
      %p55 = scmp.ne.s32.totalorder %s50, %s52
      %p56 = scmp.eq.s32.totalorder %s16, 0
      %p57 = por %p55, %p56
      %p58 = scmp.ne.s32.totalorder %s50, %s52
      %p59 = scmp.eq.s32.totalorder %s21, 1
      %p60 = por %p58, %p59
      %p61 = scmp.ne.s32.totalorder %s52, %s53
      %p62 = scmp.eq.s32.totalorder %s21, 0
      %p63 = por %p61, %p62
      %p64 = scmp.ne.s32.totalorder %s52, %s53
      %p65 = scmp.eq.s32.totalorder %s22, 1
      %p66 = por %p64, %p65
      %p68 = scmp.ne.s32.totalorder %s53, %s67
      %p69 = scmp.eq.s32.totalorder %s22, 0
      %p70 = por %p68, %p69
      %s72 = sadd.s32 %s71, 1
      %p75 = scmp.eq.s32.totalorder %s16, 1
      %p76 = scmp.ne.s32.totalorder %s71, %s73
      %p77 = scmp.eq.s32.totalorder %s16, 0
      %p78 = por %p76, %p77
      %p79 = scmp.ne.s32.totalorder %s71, %s73
      %p80 = scmp.eq.s32.totalorder %s21, 1
      %p81 = por %p79, %p80
      %p82 = scmp.ne.s32.totalorder %s73, %s74
      %p83 = scmp.eq.s32.totalorder %s21, 0
      %p84 = por %p82, %p83
      %p85 = scmp.ne.s32.totalorder %s73, %s74
      %p86 = scmp.eq.s32.totalorder %s22, 1
      %p87 = por %p85, %p86
      %p89 = scmp.ne.s32.totalorder %s74, %s88
      %p90 = scmp.eq.s32.totalorder %s22, 0
      %p91 = por %p89, %p90
      %s92 = ssub.s32 %s16, %s23
      %p93 = scmp.eq.s32.totalorder %s92, 0
      %s95 = sadd.s32 %s94, 1
      %s96 = scalar_select %p93, %s94, %s95
      %p99 = pneg %p93
      %p100 = scmp.eq.s32.totalorder %s16, 1
      %p101 = por %p99, %p100
      %p102 = scmp.ne.s32.totalorder %s94, %s97
      %p103 = scmp.eq.s32.totalorder %s16, 0
      %p104 = por %p102, %p103
      %p105 = scmp.ne.s32.totalorder %s94, %s97
      %p106 = scmp.eq.s32.totalorder %s21, 1
      %p107 = por %p105, %p106
      %p108 = scmp.ne.s32.totalorder %s97, %s98
      %p109 = scmp.eq.s32.totalorder %s21, 0
      %p110 = por %p108, %p109
      %p111 = scmp.ne.s32.totalorder %s97, %s98
      %p112 = scmp.eq.s32.totalorder %s22, 1
      %p113 = por %p111, %p112
      %p115 = scmp.ne.s32.totalorder %s98, %s114
      %p116 = scmp.eq.s32.totalorder %s22, 0
      %p117 = por %p115, %p116
      %p118 = scmp.le.s32.totalorder 1, %s16
      %p119 = scmp.lt.s32.totalorder %s16, 3
      %p120 = pnand %p118, %p119
      %p121 = pneg %p120
      // Predicated region
      $region9: #{tpu_custom_call.1} parent=5 // pred_check
        _
      $region10: #{tpu_custom_call.1} parent=5 // pred_check_branch
        %123 = sbr.rel (%p120) target = $region12
      $region11: #{tpu_custom_call.1} parent=5 // pred_region
        %s124 = ssub.s32 %s16, 1
        // Predicated region
        $region13: #{tpu_custom_call.1} parent=11 // pred_check
          %p125 = pneg %p63
        $region14: #{tpu_custom_call.1} parent=11 // pred_check_branch
          %127 = sbr.rel (%p125) target = $region16
        $region15: #{tpu_custom_call.1} parent=11 // pred_region
          %s129 = ssub.s32 256, 256
          %130 = vsyncadd [#allocation6], %s129
          %s131 = sshll.u32 [#allocation5], 4
          %s132 = int_to_ptr.vmem [resolvable:$true] %s131
          %137 = dma.hbm_to_vmem [thread:$0]  %s1, 256, %s132, [#allocation6], 128, 128, 8
        $region16: #{tpu_custom_call.1} parent=11 // pred_fallthru
          _
        // Predicated region
        $region17: #{tpu_custom_call.1} parent=11 // pred_check
          %p138 = pneg %p84
        $region18: #{tpu_custom_call.1} parent=11 // pred_check_branch
          %140 = sbr.rel (%p138) target = $region20
        $region19: #{tpu_custom_call.1} parent=11 // pred_region
          %s142 = ssub.s32 128, 128
          %143 = vsyncadd [#allocation6], %s142
          %s145 = sshll.u32 [#allocation7], 4
          %s146 = int_to_ptr.vmem [resolvable:$true] %s145
          %148 = dma.hbm_to_vmem [thread:$0]  %s2, 128, %s146, [#allocation6]
        $region20: #{tpu_custom_call.1} parent=11 // pred_fallthru
          _
      $region12: #{tpu_custom_call.1} parent=5 // pred_fallthru
        _
      %p149 = scmp.lt.s32.totalorder %s16, 2
      // Predicated region
      $region21: #{tpu_custom_call.1} parent=5 // pred_check
        %p150 = pneg %p149
      $region22: #{tpu_custom_call.1} parent=5 // pred_check_branch
        %152 = sbr.rel (%p150) target = $region24
      $region23: #{tpu_custom_call.1} parent=5 // pred_region
        // Predicated region
        $region25: #{tpu_custom_call.1} parent=23 // pred_check
          %p153 = pneg %p36
        $region26: #{tpu_custom_call.1} parent=23 // pred_check_branch
          %155 = sbr.rel (%p153) target = $region28
        $region27: #{tpu_custom_call.1} parent=23 // pred_region
          %s156 = sand.u32 %s26, 1
          %s157 = scalar_lea.sflag [#allocation3], %s156
          %s158 = sand.u32 %s26, 1
          %s159 = smul.addr %s158, 8
          %s160 = scalar_lea.vmem [#allocation2], %s159
          %s162 = ssub.s32 128, 128
          %163 = vsyncadd %s157, %s162
          %s164 = smul.addr %s16, 128
          %s165 = scalar_lea.hbm %s0, %s164
          %s167 = sshll.u32 %s160, 4
          %s168 = int_to_ptr.vmem [resolvable:$true] %s167
          %170 = dma.hbm_to_vmem [thread:$0]  %s165, 128, %s168, %s157
        $region28: #{tpu_custom_call.1} parent=23 // pred_fallthru
          _
      $region24: #{tpu_custom_call.1} parent=5 // pred_fallthru
        _
      %p171 = scmp.le.s32.totalorder 1, %s16
      %p172 = scmp.lt.s32.totalorder %s16, 3
      %p173 = pnand %p171, %p172
      %p174 = pneg %p173
      // Predicated region
      $region29: #{tpu_custom_call.1} parent=5 // pred_check
        _
      $region30: #{tpu_custom_call.1} parent=5 // pred_check_branch
        %176 = sbr.rel (%p173) target = $region32
      $region31: #{tpu_custom_call.1} parent=5 // pred_region
        %s177 = ssub.s32 %s16, 1
        %s178 = sand.u32 %s29, 1
        %s179 = scalar_lea.sflag [#allocation3], %s178
        %s180 = sand.u32 %s29, 1
        %s181 = smul.addr %s180, 8
        %s182 = scalar_lea.vmem [#allocation2], %s181
        // Predicated region
        $region33: #{tpu_custom_call.1} parent=31 // pred_check
          %p183 = pneg %p42
        $region34: #{tpu_custom_call.1} parent=31 // pred_check_branch
          %185 = sbr.rel (%p183) target = $region36
        $region35: #{tpu_custom_call.1} parent=31 // pred_region
          %186 = dma.done %s179, 128
        $region36: #{tpu_custom_call.1} parent=31 // pred_fallthru
          _
        // Predicated region
        $region37: #{tpu_custom_call.1} parent=31 // pred_check
          %p187 = pneg %p63
        $region38: #{tpu_custom_call.1} parent=31 // pred_check_branch
          %189 = sbr.rel (%p187) target = $region40
        $region39: #{tpu_custom_call.1} parent=31 // pred_region
          %190 = dma.done [#allocation6], 256
        $region40: #{tpu_custom_call.1} parent=31 // pred_fallthru
          _
        // Predicated region
        $region41: #{tpu_custom_call.1} parent=31 // pred_check
          %p191 = pneg %p84
        $region42: #{tpu_custom_call.1} parent=31 // pred_check_branch
          %193 = sbr.rel (%p191) target = $region44
        $region43: #{tpu_custom_call.1} parent=31 // pred_region
          %194 = dma.done [#allocation6], 128
        $region44: #{tpu_custom_call.1} parent=31 // pred_fallthru
          _
        %s195 = sand.u32 %s29, 1
        %s196 = scalar_lea.sflag [#allocation3], %s195
        %s197 = sand.u32 %s29, 1
        %s198 = smul.addr %s197, 8
        %s199 = scalar_lea.vmem [#allocation2], %s198
        %p200 = pneg %p42
        %p201 = pneg %p39
        %p202 = pneg %p63
        %p203 = pneg %p60
        %p204 = pneg %p84
        %p205 = pneg %p81
        %p206 = pneg %p110
        %p207 = pneg %p107
        %s208 = sand.u32 %s97, 1
        %s209 = scalar_lea.sflag [#allocation4], %s208
        %s210 = sand.u32 %s97, 1
        %s211 = smul.addr %s210, 8
        %s212 = scalar_lea.vmem [#allocation8], %s211
        %v213 = vld [vmem:[%s182] sm:$0xff]
        %v214 = vld [vmem:[#allocation5] sm:$0xff]
        %v215 = vld [vmem:[#allocation5 + $0x8] sm:$0xff]
        %vm216 = vcmask 130048
        %v218 = vsel %vm216, %v213, 0
        %220 = vmatprep.subr.mxu0 0.0
        %221 = vmatpush1.msra.mxu0 %v214
        %222 = vmatprep.subr.mxu0 0.0
        %223 = vmatpush1.msra.mxu0 %v215
        %224 = vmatprep.subr.mxu0 0.0
        %225 = vmatpush1.msra.mxu0 0.0
        %226 = vmatprep.subr.mxu0 0.0
        %227 = vmatpush1.msra.mxu0 0.0
        %228 = vmatprep.subr.mxu0 0.0
        %229 = vmatpush1.msra.mxu0 0.0
        %230 = vmatprep.subr.mxu0 0.0
        %231 = vmatpush1.msra.mxu0 0.0
        %232 = vmatprep.subr.mxu0 0.0
        %233 = vmatpush1.msra.mxu0 0.0
        %234 = vmatprep.subr.mxu0 0.0
        %235 = vmatpush1.msra.mxu0 0.0
        %236 = vmatprep.subr.mxu0 0.0
        %237 = vmatpush1.msra.mxu0 0.0
        %238 = vmatprep.subr.mxu0 0.0
        %239 = vmatpush1.msra.mxu0 0.0
        %240 = vmatprep.subr.mxu0 0.0
        %241 = vmatpush1.msra.mxu0 0.0
        %242 = vmatprep.subr.mxu0 0.0
        %243 = vmatpush1.msra.mxu0 0.0
        %244 = vmatprep.subr.mxu0 0.0
        %245 = vmatpush1.msra.mxu0 0.0
        %246 = vmatprep.subr.mxu0 0.0
        %247 = vmatpush1.msra.mxu0 0.0
        %248 = vmatprep.subr.mxu0 0.0
        %249 = vmatpush1.msra.mxu0 0.0
        %250 = vmatprep.subr.mxu0 0.0
        %251 = vmatpush1.msra.mxu0 0.0
        %252 = vmatprep.subr.mxu0 0.0
        %253 = vmatpush1.msra.mxu0 0.0
        %254 = vmatprep.subr.mxu0 0.0
        %255 = vmatpush1.msra.mxu0 0.0
        %256 = vmatprep.subr.mxu0 0.0
        %257 = vmatpush1.msra.mxu0 0.0
        %258 = vmatprep.subr.mxu0 0.0
        %259 = vmatpush1.msra.mxu0 0.0
        %260 = vmatprep.subr.mxu0 0.0
        %261 = vmatpush1.msra.mxu0 0.0
        %262 = vmatprep.subr.mxu0 0.0
        %263 = vmatpush1.msra.mxu0 0.0
        %264 = vmatprep.subr.mxu0 0.0
        %265 = vmatpush1.msra.mxu0 0.0
        %266 = vmatprep.subr.mxu0 0.0
        %267 = vmatpush1.msra.mxu0 0.0
        %268 = vmatprep.subr.mxu0 0.0
        %269 = vmatpush1.msra.mxu0 0.0
        %270 = vmatprep.subr.mxu0 0.0
        %271 = vmatpush1.msra.mxu0 0.0
        %272 = vmatprep.subr.mxu0 0.0
        %273 = vmatpush1.msra.mxu0 0.0
        %274 = vmatprep.subr.mxu0 0.0
        %275 = vmatpush1.msra.mxu0 0.0
        %276 = vmatprep.subr.mxu0 0.0
        %277 = vmatpush1.msra.mxu0 0.0
        %278 = vmatprep.subr.mxu0 0.0
        %279 = vmatpush1.msra.mxu0 0.0
        %280 = vmatprep.subr.mxu0 0.0
        %281 = vmatpush1.msra.mxu0 0.0
        %282 = vmatprep.subr.mxu0 0.0
        %283 = vmatpush1.msra.mxu0 0.0
        %284 = vmatprep.mubr.f32.mxu0 0.0
        %285 = vmatmul.mubr.f32.gmra.mrb[0].mxu0 %v218
        %v286 = vpop.f32.mrb[0].mxu0
        %v287 = vadd.f32 0.0, %v286
        %v288 = vpop.f32.mrb[0].mxu0
        %289 = vdwg.mxu0
        %v290 = vld [vmem:[#allocation7] sm:$0xff]
        %292 = vrot.lane.b32.xlu0 %v287, 64
        %v293 = vpop.permute.xlu0 %292
        %vm294 = vcmask 523264
        %v295 = vsel %vm294, %v287, 0
        %v297 = vsel %vm294, %v293, 0
        %299 = vmatprep.subr.mxu0 0.0
        %300 = vmatpush1.xpose.msra.mxu0 %v297
        %301 = vmatprep.subr.mxu0 0.0
        %302 = vmatpush1.xpose.msra.mxu0 0.0
        %303 = vmatprep.subr.mxu0 0.0
        %304 = vmatpush1.xpose.msra.mxu0 0.0
        %305 = vmatprep.subr.mxu0 0.0
        %306 = vmatpush1.xpose.msra.mxu0 0.0
        %307 = vmatprep.subr.mxu0 0.0
        %308 = vmatpush1.xpose.msra.mxu0 0.0
        %309 = vmatprep.subr.mxu0 0.0
        %310 = vmatpush1.xpose.msra.mxu0 0.0
        %311 = vmatprep.subr.mxu0 0.0
        %312 = vmatpush1.xpose.msra.mxu0 0.0
        %313 = vmatprep.subr.mxu0 0.0
        %314 = vmatpush1.xpose.msra.mxu0 0.0
        %315 = vmatprep.subr.mxu0 0.0
        %316 = vmatpush1.xpose.msra.mxu0 0.0
        %317 = vmatprep.subr.mxu0 0.0
        %318 = vmatpush1.xpose.msra.mxu0 0.0
        %319 = vmatprep.subr.mxu0 0.0
        %320 = vmatpush1.xpose.msra.mxu0 0.0
        %321 = vmatprep.subr.mxu0 0.0
        %322 = vmatpush1.xpose.msra.mxu0 0.0
        %323 = vmatprep.subr.mxu0 0.0
        %324 = vmatpush1.xpose.msra.mxu0 0.0
        %325 = vmatprep.subr.mxu0 0.0
        %326 = vmatpush1.xpose.msra.mxu0 0.0
        %327 = vmatprep.subr.mxu0 0.0
        %328 = vmatpush1.xpose.msra.mxu0 0.0
        %329 = vmatprep.subr.mxu0 0.0
        %330 = vmatpush1.xpose.msra.mxu0 0.0
        %331 = vmatprep.subr.mxu0 0.0
        %332 = vmatpush1.xpose.msra.mxu0 0.0
        %333 = vmatprep.subr.mxu0 0.0
        %334 = vmatpush1.xpose.msra.mxu0 0.0
        %335 = vmatprep.subr.mxu0 0.0
        %336 = vmatpush1.xpose.msra.mxu0 0.0
        %337 = vmatprep.subr.mxu0 0.0
        %338 = vmatpush1.xpose.msra.mxu0 0.0
        %339 = vmatprep.subr.mxu0 0.0
        %340 = vmatpush1.xpose.msra.mxu0 0.0
        %341 = vmatprep.subr.mxu0 0.0
        %342 = vmatpush1.xpose.msra.mxu0 0.0
        %343 = vmatprep.subr.mxu0 0.0
        %344 = vmatpush1.xpose.msra.mxu0 0.0
        %345 = vmatprep.subr.mxu0 0.0
        %346 = vmatpush1.xpose.msra.mxu0 0.0
        %347 = vmatprep.subr.mxu0 0.0
        %348 = vmatpush1.xpose.msra.mxu0 0.0
        %349 = vmatprep.subr.mxu0 0.0
        %350 = vmatpush1.xpose.msra.mxu0 0.0
        %351 = vmatprep.subr.mxu0 0.0
        %352 = vmatpush1.xpose.msra.mxu0 0.0
        %353 = vmatprep.subr.mxu0 0.0
        %354 = vmatpush1.xpose.msra.mxu0 0.0
        %355 = vmatprep.subr.mxu0 0.0
        %356 = vmatpush1.xpose.msra.mxu0 0.0
        %357 = vmatprep.subr.mxu0 0.0
        %358 = vmatpush1.xpose.msra.mxu0 0.0
        %359 = vmatprep.subr.mxu0 0.0
        %360 = vmatpush1.xpose.msra.mxu0 0.0
        %361 = vmatprep.subr.mxu0 0.0
        %362 = vmatpush1.xpose.msra.mxu0 0.0
        %363 = vmatprep.mubr.f32.mxu0 0.0
        %364 = vmatmul.mubr.f32.gmra.mrb[0].mxu0 %v295
        %v365 = vpop.f32.mrb[0].mxu0
        %v366 = vadd.f32 %v290, %v365
        %v367 = vpop.f32.mrb[0].mxu0
        %368 = vdwg.mxu0
        %vm369 = vcmask 64512
        %v370 = vsel %vm369, %v366, -inf
        %371 = vmax.xlane.f32.xlu0 %v370
        %v372 = vpop.xlane.xlu0 %371
        %v373 = vsub.f32 %v366, %v372
        %v374 = vmul.f32 %v373, 1.442695
        %v375 = vpow.pop %v374
        %v376 = vsel %vm369, %v375, 0.0
        %377 = vadd.xlane.f32.xlu0 %v376
        %v378 = vpop.xlane.xlu0 %377
        %v379 = vrcp.pop %v378
        %v380 = vmul.f32 %v375, %v379
        %v382 = vsel %vm369, %v380, 0
        %384 = vmatprep.subr.mxu0 0.0
        %385 = vmatpush1.msra.mxu0 %v213
        %386 = vmatprep.subr.mxu0 0.0
        %387 = vmatpush1.msra.mxu0 0.0
        %388 = vmatprep.subr.mxu0 0.0
        %389 = vmatpush1.msra.mxu0 0.0
        %390 = vmatprep.subr.mxu0 0.0
        %391 = vmatpush1.msra.mxu0 0.0
        %392 = vmatprep.subr.mxu0 0.0
        %393 = vmatpush1.msra.mxu0 0.0
        %394 = vmatprep.subr.mxu0 0.0
        %395 = vmatpush1.msra.mxu0 0.0
        %396 = vmatprep.subr.mxu0 0.0
        %397 = vmatpush1.msra.mxu0 0.0
        %398 = vmatprep.subr.mxu0 0.0
        %399 = vmatpush1.msra.mxu0 0.0
        %400 = vmatprep.subr.mxu0 0.0
        %401 = vmatpush1.msra.mxu0 0.0
        %402 = vmatprep.subr.mxu0 0.0
        %403 = vmatpush1.msra.mxu0 0.0
        %404 = vmatprep.subr.mxu0 0.0
        %405 = vmatpush1.msra.mxu0 0.0
        %406 = vmatprep.subr.mxu0 0.0
        %407 = vmatpush1.msra.mxu0 0.0
        %408 = vmatprep.subr.mxu0 0.0
        %409 = vmatpush1.msra.mxu0 0.0
        %410 = vmatprep.subr.mxu0 0.0
        %411 = vmatpush1.msra.mxu0 0.0
        %412 = vmatprep.subr.mxu0 0.0
        %413 = vmatpush1.msra.mxu0 0.0
        %414 = vmatprep.subr.mxu0 0.0
        %415 = vmatpush1.msra.mxu0 0.0
        %416 = vmatprep.subr.mxu0 0.0
        %417 = vmatpush1.msra.mxu0 0.0
        %418 = vmatprep.subr.mxu0 0.0
        %419 = vmatpush1.msra.mxu0 0.0
        %420 = vmatprep.subr.mxu0 0.0
        %421 = vmatpush1.msra.mxu0 0.0
        %422 = vmatprep.subr.mxu0 0.0
        %423 = vmatpush1.msra.mxu0 0.0
        %424 = vmatprep.subr.mxu0 0.0
        %425 = vmatpush1.msra.mxu0 0.0
        %426 = vmatprep.subr.mxu0 0.0
        %427 = vmatpush1.msra.mxu0 0.0
        %428 = vmatprep.subr.mxu0 0.0
        %429 = vmatpush1.msra.mxu0 0.0
        %430 = vmatprep.subr.mxu0 0.0
        %431 = vmatpush1.msra.mxu0 0.0
        %432 = vmatprep.subr.mxu0 0.0
        %433 = vmatpush1.msra.mxu0 0.0
        %434 = vmatprep.subr.mxu0 0.0
        %435 = vmatpush1.msra.mxu0 0.0
        %436 = vmatprep.subr.mxu0 0.0
        %437 = vmatpush1.msra.mxu0 0.0
        %438 = vmatprep.subr.mxu0 0.0
        %439 = vmatpush1.msra.mxu0 0.0
        %440 = vmatprep.subr.mxu0 0.0
        %441 = vmatpush1.msra.mxu0 0.0
        %442 = vmatprep.subr.mxu0 0.0
        %443 = vmatpush1.msra.mxu0 0.0
        %444 = vmatprep.subr.mxu0 0.0
        %445 = vmatpush1.msra.mxu0 0.0
        %446 = vmatprep.subr.mxu0 0.0
        %447 = vmatpush1.msra.mxu0 0.0
        %448 = vmatprep.mubr.f32.mxu0 0.0
        %449 = vmatmul.mubr.f32.gmra.mrb[0].mxu0 %v382
        %v450 = vpop.f32.mrb[0].mxu0
        %v451 = vadd.f32 0.0, %v450
        %v452 = vpop.f32.mrb[0].mxu0
        %453 = vdwg.mxu0
        %454 = vst.msk [vmem:[%s212] sm:$0xff] %vm216, %v451
        %s455 = sand.u32 %s97, 1
        %s456 = scalar_lea.sflag [#allocation4], %s455
        %s457 = sand.u32 %s97, 1
        %s458 = smul.addr %s457, 8
        %s459 = scalar_lea.vmem [#allocation8], %s458
        // Predicated region
        $region45: #{tpu_custom_call.1} parent=31 // pred_check
          %p460 = pneg %p107
        $region46: #{tpu_custom_call.1} parent=31 // pred_check_branch
          %462 = sbr.rel (%p460) target = $region48
        $region47: #{tpu_custom_call.1} parent=31 // pred_region
          %s464 = ssub.s32 128, 128
          %465 = vsyncadd %s456, %s464
          %s466 = smul.addr %s21, 128
          %s467 = scalar_lea.hbm %s3, %s466
          %s469 = sshll.u32 %s459, 4
          %s470 = int_to_ptr.vmem [resolvable:$true] %s469
          %472 = dma.vmem_to_hbm [thread:$0]  %s470, 128, %s467, %s456
        $region48: #{tpu_custom_call.1} parent=31 // pred_fallthru
          _
      $region32: #{tpu_custom_call.1} parent=5 // pred_fallthru
        _
      %p473 = scmp.le.s32.totalorder 2, %s16
      // Predicated region
      $region49: #{tpu_custom_call.1} parent=5 // pred_check
        %p474 = pneg %p473
      $region50: #{tpu_custom_call.1} parent=5 // pred_check_branch
        %476 = sbr.rel (%p474) target = $region52
      $region51: #{tpu_custom_call.1} parent=5 // pred_region
        %s477 = ssub.s32 %s16, 2
        // Predicated region
        $region53: #{tpu_custom_call.1} parent=51 // pred_check
          %p478 = pneg %p113
        $region54: #{tpu_custom_call.1} parent=51 // pred_check_branch
          %480 = sbr.rel (%p478) target = $region56
        $region55: #{tpu_custom_call.1} parent=51 // pred_region
          %s481 = sand.u32 %s98, 1
          %s482 = scalar_lea.sflag [#allocation4], %s481
          %s483 = sand.u32 %s98, 1
          %s484 = smul.addr %s483, 8
          %s485 = scalar_lea.vmem [#allocation8], %s484
          %486 = dma.done %s482, 128
        $region56: #{tpu_custom_call.1} parent=51 // pred_fallthru
          _
      $region52: #{tpu_custom_call.1} parent=5 // pred_fallthru
        _
    $region6: #{tpu_custom_call.1} parent=1 // loop_footer
      %s20 = sadd.s32 1, %s16
    $region7: #{tpu_custom_call.1} parent=1 // loop_footer_branch
      %15 = sbr.rel target = $region3
    $region8: #{tpu_custom_call.1} parent=1 // loop_exit
      _
    %487 = vsyncpa [#allocation3], 1
    %s488 = scalar_lea.sflag [#allocation3], 1
    %489 = vsyncpa %s488, 1
    %490 = vsyncpa [#allocation6], 1
    %491 = vsyncpa [#allocation4], 1
    %s492 = scalar_lea.sflag [#allocation4], 1
    %493 = vsyncpa %s492, 1

</llo_original>
